<compile_context>
chip_gen: v7x
topology: tpu7x:2x2x1
jax: 0.10.0
libtpu: 0.0.40
codegen_flags: <defaults>
</compile_context>

<pallas_src>
import jax
import jax.numpy as jnp
from jax.experimental import pallas as pl
from jax.experimental.pallas import tpu as pltpu

SUBLANE_BF16 = 16   # bf16 sublane packing (second-to-last-dim tiling unit)


def _round_up(x, m):
    return ((x + m - 1) // m) * m


def qnetwork_kernel(x_ref, w1_ref, b1_ref, w2_ref, b2_ref, w3_ref, b3_ref, o_ref):
    """fc1 -> ReLU -> fc2 -> ReLU -> fc3 on one (tile_B, S) activation block."""
    x = x_ref[...].astype(jnp.bfloat16)                                  # native-dtype load, VPU cast
    h1 = jnp.dot(x, w1_ref[...], preferred_element_type=jnp.float32)    # (tB, F1) f32 acc
    h1 = jnp.maximum(h1 + b1_ref[...], 0.0)                             # bias+ReLU in f32
    h2 = jnp.dot(h1.astype(w2_ref.dtype), w2_ref[...],
                 preferred_element_type=jnp.float32)                    # (tB, F2) f32 acc
    h2 = jnp.maximum(h2 + b2_ref[...], 0.0)
    q = jnp.dot(h2.astype(w3_ref.dtype), w3_ref[...],
                preferred_element_type=jnp.float32)                     # (tB, A)  f32 acc
    o_ref[...] = (q + b3_ref[...]).astype(o_ref.dtype)                  # bf16 store, unpadded lanes


def _build_qnet_call(B_pad, tile_B, S, F1, F2, A, out_dtype, dim_semantics,
                     flops, bytes_accessed):
    # Weights/biases: constant index_map -> fetched once, VMEM-resident across grid steps.
    resident = lambda shape: pl.BlockSpec(shape, lambda i: (0, 0))
    return pl.pallas_call(
        qnetwork_kernel,
        out_shape=jax.ShapeDtypeStruct((B_pad, A), out_dtype),
        grid=(B_pad // tile_B,),
        in_specs=[
            pl.BlockSpec((tile_B, S), lambda i: (i, 0)),   # activations: pipelined per tile
            resident((S, F1)), resident((1, F1)),          # fc1 weight / bias
            resident((F1, F2)), resident((1, F2)),         # fc2 weight / bias
            resident((F2, A)), resident((1, A)),           # fc3 weight / bias (unpadded)
        ],
        out_specs=pl.BlockSpec((tile_B, A), lambda i: (i, 0)),
        compiler_params=pltpu.CompilerParams(
            dimension_semantics=dim_semantics,
            vmem_limit_bytes=32 * 1024 * 1024,             # KB..MB-scale footprint, safe on v7x too
        ),
        cost_estimate=pl.CostEstimate(
            flops=flops, transcendentals=0, bytes_accessed=bytes_accessed),
    )


def prepare_params(params):
    """One-time prep (call OUTSIDE the per-step hot path): weights -> bf16 (MXU
    input dtype), biases -> f32 row vectors (post-matmul path stays f32)."""
    w1, b1, w2, b2, w3, b3 = params
    return (
        w1.astype(jnp.bfloat16), b1.astype(jnp.float32).reshape(1, -1),
        w2.astype(jnp.bfloat16), b2.astype(jnp.float32).reshape(1, -1),
        w3.astype(jnp.bfloat16), b3.astype(jnp.float32).reshape(1, -1),
    )


def qnetwork_forward(state, prepared_params, *, batch_tile=4096):
    """prepared_params = prepare_params((w1,b1,w2,b2,w3,b3)); weights are (in,out)=W_pt.T."""
    w1, b1, w2, b2, w3, b3 = prepared_params
    B, S = state.shape
    F1 = w1.shape[1]
    F2 = w2.shape[1]
    A = w3.shape[1]

    # Batch tiling: big tiles (default up to 4096 rows) to amortize per-grid-step
    # overhead; scaled down for small B; multiple of the bf16 sublane pack.
    tile_B = _round_up(min(batch_tile, B), SUBLANE_BF16)
    B_pad = _round_up(B, tile_B)
    num_tiles = B_pad // tile_B

    # Only pad (extra HBM copy) when actually needed.
    x = state if B_pad == B else jnp.pad(state, ((0, B_pad - B), (0, 0)))

    itemsize = jnp.dtype(state.dtype).itemsize
    flops = 2 * B_pad * (S * F1 + F1 * F2 + F2 * A)
    bytes_accessed = (
        B_pad * S * itemsize                               # activations in (native dtype)
        + (w1.size + w2.size + w3.size) * 2                # bf16 weights (read once)
        + (b1.size + b2.size + b3.size) * 4                # f32 biases
        + B_pad * A * 2                                    # bf16 q-values out
    )

    # v7x: shard batch tiles across both TensorCores when there is enough work.
    if num_tiles > 1 and hasattr(pltpu, "CORE_PARALLEL"):
        dim_sem = (pltpu.CORE_PARALLEL,)
    else:
        dim_sem = ("parallel",)

    args = (x, w1, b1, w2, b2, w3, b3)
    try:
        out = _build_qnet_call(B_pad, tile_B, S, F1, F2, A, jnp.bfloat16,
                               dim_sem, flops, bytes_accessed)(*args)
    except Exception:
        if dim_sem == ("parallel",):
            raise
        # Fallback for chips / versions where CORE_PARALLEL does not lower.
        out = _build_qnet_call(B_pad, tile_B, S, F1, F2, A, jnp.bfloat16,
                               ("parallel",), flops, bytes_accessed)(*args)

    if B_pad != B:
        out = out[:B]
    return out.astype(state.dtype)


def init_params(key, state_size, action_size, fc1=64, fc2=64, dtype=jnp.float32):
    """Deterministic init mimicking PyTorch's default nn.Linear init:
    U(-1/sqrt(fan_in), 1/sqrt(fan_in)) for both weights and biases."""
    keys = jax.random.split(key, 6)

    def linear(kw, kb, fan_in, fan_out):
        bound = 1.0 / jnp.sqrt(fan_in)
        w = jax.random.uniform(kw, (fan_in, fan_out), dtype, -bound, bound)
        b = jax.random.uniform(kb, (1, fan_out), dtype, -bound, bound)
        return w, b

    w1, b1 = linear(keys[0], keys[1], state_size, fc1)
    w2, b2 = linear(keys[2], keys[3], fc1, fc2)
    w3, b3 = linear(keys[4], keys[5], fc2, action_size)
    return (w1, b1, w2, b2, w3, b3)


if __name__ == "__main__":
    # Small shapes consistent with the module: state_size=8, action_size=4,
    # hidden fc1=fc2=64, batch=2.  (dropout_prob in the module is unused.)
    batch, state_size, action_size = 2, 8, 4

    key = jax.random.PRNGKey(0)
    k_params, k_state = jax.random.split(key)

    raw_params = init_params(k_params, state_size, action_size, fc1=64, fc2=64)
    prepared = prepare_params(raw_params)   # one-time cast, hoisted out of the hot path
    state = jax.random.normal(k_state, (batch, state_size), dtype=jnp.float32)

    q_values = qnetwork_forward(state, prepared)
    jax.block_until_ready(q_values)
    assert q_values.shape == (batch, action_size)

    w1, b1, w2, b2, w3, b3 = raw_params

    # Reference 1: mirrors the kernel's bf16-MXU / f32-accumulate numerics
    # (kernel additionally rounds the final store to bf16 -> small extra tol).
    xb = state.astype(jnp.bfloat16)
    h = jnp.maximum(jnp.dot(xb, w1.astype(jnp.bfloat16),
                            preferred_element_type=jnp.float32) + b1, 0.0)
    h = jnp.maximum(jnp.dot(h.astype(jnp.bfloat16), w2.astype(jnp.bfloat16),
                            preferred_element_type=jnp.float32) + b2, 0.0)
    ref_bf16 = jnp.dot(h.astype(jnp.bfloat16), w3.astype(jnp.bfloat16),
                       preferred_element_type=jnp.float32) + b3
    assert jnp.allclose(q_values, ref_bf16, atol=2e-2, rtol=2e-2)

    # Reference 2: full-f32 math (the PyTorch module semantics), loose tolerance
    # because the kernel uses bf16 inputs/weights/output.
    h = jnp.maximum(state @ w1 + b1, 0.0)
    h = jnp.maximum(h @ w2 + b2, 0.0)
    ref_f32 = h @ w3 + b3
    assert jnp.allclose(q_values, ref_f32, atol=1.5e-1, rtol=1.5e-1)

    print("KERNEL_OK")
</pallas_src>

<mosaic_0001>
module attributes {stable_mosaic.version = 11 : i64} {
  func.func @qnetwork_kernel(%arg0: i32, %arg1: memref<16x8xf32, #tpu.memory_space<vmem>>, %arg2: memref<8x64xbf16, #tpu.memory_space<vmem>>, %arg3: memref<1x64xf32, #tpu.memory_space<vmem>>, %arg4: memref<64x64xbf16, #tpu.memory_space<vmem>>, %arg5: memref<1x64xf32, #tpu.memory_space<vmem>>, %arg6: memref<64x4xbf16, #tpu.memory_space<vmem>>, %arg7: memref<1x4xf32, #tpu.memory_space<vmem>>, %arg8: memref<16x4xbf16, #tpu.memory_space<vmem>>) attributes {dimension_semantics = [#tpu.dimension_semantics<parallel>], iteration_bounds = array<i64: 1>, scalar_prefetch = 0 : i64, scratch_operands = 0 : i64, tpu.core_type = #tpu.core_type<tc>, window_params = [{transform_indices = @transform_0, window_bounds = array<i64: 16, 8>}, {pipeline_mode = #tpu.pipeline_mode<synchronous>, transform_indices = @transform_1, window_bounds = array<i64: 8, 64>}, {pipeline_mode = #tpu.pipeline_mode<synchronous>, transform_indices = @transform_2, window_bounds = array<i64: 1, 64>}, {pipeline_mode = #tpu.pipeline_mode<synchronous>, transform_indices = @transform_3, window_bounds = array<i64: 64, 64>}, {pipeline_mode = #tpu.pipeline_mode<synchronous>, transform_indices = @transform_4, window_bounds = array<i64: 1, 64>}, {pipeline_mode = #tpu.pipeline_mode<synchronous>, transform_indices = @transform_5, window_bounds = array<i64: 64, 4>}, {pipeline_mode = #tpu.pipeline_mode<synchronous>, transform_indices = @transform_6, window_bounds = array<i64: 1, 4>}, {transform_indices = @transform_7, window_bounds = array<i64: 16, 4>}]} {
    %c0 = arith.constant 0 : index
    %c0_0 = arith.constant 0 : index
    %0 = vector.load %arg1[%c0, %c0_0] : memref<16x8xf32, #tpu.memory_space<vmem>>, vector<16x8xf32>
    %1 = arith.truncf %0 : vector<16x8xf32> to vector<16x8xbf16>
    %c0_1 = arith.constant 0 : index
    %c0_2 = arith.constant 0 : index
    %2 = vector.load %arg2[%c0_1, %c0_2] : memref<8x64xbf16, #tpu.memory_space<vmem>>, vector<8x64xbf16>
    %cst = arith.constant dense<0.000000e+00> : vector<16x64xf32>
    %3 = tpu.matmul %1, %2, %cst {dimension_numbers = #tpu.dot_dimension_numbers<[1], [0], [0], [1], [0, 0, 1, 1], [], []>} : vector<16x8xbf16>, vector<8x64xbf16>, vector<16x64xf32> -> vector<16x64xf32>
    %c0_3 = arith.constant 0 : index
    %c0_4 = arith.constant 0 : index
    %4 = vector.load %arg3[%c0_3, %c0_4] : memref<1x64xf32, #tpu.memory_space<vmem>>, vector<1x64xf32>
    %5 = vector.broadcast %4 : vector<1x64xf32> to vector<16x64xf32>
    %6 = arith.addf %3, %5 : vector<16x64xf32>
    %cst_5 = arith.constant 0.000000e+00 : f32
    %7 = vector.broadcast %cst_5 : f32 to vector<16x64xf32>
    %8 = arith.maximumf %6, %7 : vector<16x64xf32>
    %9 = arith.truncf %8 : vector<16x64xf32> to vector<16x64xbf16>
    %c0_6 = arith.constant 0 : index
    %c0_7 = arith.constant 0 : index
    %10 = vector.load %arg4[%c0_6, %c0_7] : memref<64x64xbf16, #tpu.memory_space<vmem>>, vector<64x64xbf16>
    %cst_8 = arith.constant dense<0.000000e+00> : vector<16x64xf32>
    %11 = tpu.matmul %9, %10, %cst_8 {dimension_numbers = #tpu.dot_dimension_numbers<[1], [0], [0], [1], [0, 0, 1, 1], [], []>} : vector<16x64xbf16>, vector<64x64xbf16>, vector<16x64xf32> -> vector<16x64xf32>
    %c0_9 = arith.constant 0 : index
    %c0_10 = arith.constant 0 : index
    %12 = vector.load %arg5[%c0_9, %c0_10] : memref<1x64xf32, #tpu.memory_space<vmem>>, vector<1x64xf32>
    %13 = vector.broadcast %12 : vector<1x64xf32> to vector<16x64xf32>
    %14 = arith.addf %11, %13 : vector<16x64xf32>
    %cst_11 = arith.constant 0.000000e+00 : f32
    %15 = vector.broadcast %cst_11 : f32 to vector<16x64xf32>
    %16 = arith.maximumf %14, %15 : vector<16x64xf32>
    %17 = arith.truncf %16 : vector<16x64xf32> to vector<16x64xbf16>
    %c0_12 = arith.constant 0 : index
    %c0_13 = arith.constant 0 : index
    %18 = vector.load %arg6[%c0_12, %c0_13] : memref<64x4xbf16, #tpu.memory_space<vmem>>, vector<64x4xbf16>
    %cst_14 = arith.constant dense<0.000000e+00> : vector<16x4xf32>
    %19 = tpu.matmul %17, %18, %cst_14 {dimension_numbers = #tpu.dot_dimension_numbers<[1], [0], [0], [1], [0, 0, 1, 1], [], []>} : vector<16x64xbf16>, vector<64x4xbf16>, vector<16x4xf32> -> vector<16x4xf32>
    %c0_15 = arith.constant 0 : index
    %c0_16 = arith.constant 0 : index
    %20 = vector.load %arg7[%c0_15, %c0_16] : memref<1x4xf32, #tpu.memory_space<vmem>>, vector<1x4xf32>
    %21 = vector.broadcast %20 : vector<1x4xf32> to vector<16x4xf32>
    %22 = arith.addf %19, %21 : vector<16x4xf32>
    %23 = arith.truncf %22 : vector<16x4xf32> to vector<16x4xbf16>
    %c0_17 = arith.constant 0 : index
    %c0_18 = arith.constant 0 : index
    %24 = vector.load %arg8[%c0_17, %c0_18] : memref<16x4xbf16, #tpu.memory_space<vmem>>, vector<16x4xbf16>
    tpu.vector_store %arg8[%c0_17, %c0_18], %23 {strides = array<i32>} : memref<16x4xbf16, #tpu.memory_space<vmem>>, vector<16x4xbf16>,
    return
  }
  func.func @transform_0(%arg0: i32) -> (i32, i32) {
    %c0_i32 = arith.constant 0 : i32
    %c0_i32_0 = arith.constant 0 : i32
    return %arg0, %c0_i32 : i32, i32
  }
  func.func @transform_1(%arg0: i32) -> (i32, i32) {
    %c0_i32 = arith.constant 0 : i32
    %c0_i32_0 = arith.constant 0 : i32
    %c0_i32_1 = arith.constant 0 : i32
    return %c0_i32, %c0_i32_0 : i32, i32
  }
  func.func @transform_2(%arg0: i32) -> (i32, i32) {
    %c0_i32 = arith.constant 0 : i32
    %c0_i32_0 = arith.constant 0 : i32
    %c0_i32_1 = arith.constant 0 : i32
    return %c0_i32, %c0_i32_0 : i32, i32
  }
  func.func @transform_3(%arg0: i32) -> (i32, i32) {
    %c0_i32 = arith.constant 0 : i32
    %c0_i32_0 = arith.constant 0 : i32
    %c0_i32_1 = arith.constant 0 : i32
    return %c0_i32, %c0_i32_0 : i32, i32
  }
  func.func @transform_4(%arg0: i32) -> (i32, i32) {
    %c0_i32 = arith.constant 0 : i32
    %c0_i32_0 = arith.constant 0 : i32
    %c0_i32_1 = arith.constant 0 : i32
    return %c0_i32, %c0_i32_0 : i32, i32
  }
  func.func @transform_5(%arg0: i32) -> (i32, i32) {
    %c0_i32 = arith.constant 0 : i32
    %c0_i32_0 = arith.constant 0 : i32
    %c0_i32_1 = arith.constant 0 : i32
    return %c0_i32, %c0_i32_0 : i32, i32
  }
  func.func @transform_6(%arg0: i32) -> (i32, i32) {
    %c0_i32 = arith.constant 0 : i32
    %c0_i32_0 = arith.constant 0 : i32
    %c0_i32_1 = arith.constant 0 : i32
    return %c0_i32, %c0_i32_0 : i32, i32
  }
  func.func @transform_7(%arg0: i32) -> (i32, i32) {
    %c0_i32 = arith.constant 0 : i32
    %c0_i32_0 = arith.constant 0 : i32
    return %arg0, %c0_i32 : i32, i32
  }
}

</mosaic_0001>

<llo_original>
// kernel: tpu_custom_call.1
$region0: #{tpu_custom_call.1}
  #allocation0 [shape = 'u32[]', space=smem, size = 0x4, offset = 0x4, fixed_abs, tag = 'smem constant byte address 0x4 - core index']
  #allocation1 [shape = 'u32[144,128]{1,0:T(1,128)}', space=vmem, size = 0x12000, scoped, tag = 'internal scratch']
  %s0 = inlined_call_operand.vmem [shape: f32[16,8], index: 0, kind: input, shape index: {}]
  %s1 = inlined_call_operand.vmem [shape: bf16[8,64], index: 1, kind: input, shape index: {}]
  %s2 = inlined_call_operand.vmem [shape: f32[1,64], index: 2, kind: input, shape index: {}]
  %s3 = inlined_call_operand.vmem [shape: bf16[64,64], index: 3, kind: input, shape index: {}]
  %s4 = inlined_call_operand.vmem [shape: f32[1,64], index: 4, kind: input, shape index: {}]
  %s5 = inlined_call_operand.vmem [shape: bf16[64,4], index: 5, kind: input, shape index: {}]
  %s6 = inlined_call_operand.vmem [shape: f32[1,4], index: 6, kind: input, shape index: {}]
  %s7 = inlined_call_operand.vmem [shape: bf16[16,4], index: 7, kind: output, shape index: {}]
  %s8 = sld [smem:[#allocation0]]
  $region38: #{tpu_custom_call.1} parent=0
    _
  %s10 = ssub.s32 1, %s8
  %s11 = scalar_select 0, %s10, %s8
  // Predicated region
  $region2: #{tpu_custom_call.1} parent=0 // pred_check
    _
  $region3: #{tpu_custom_call.1} parent=0 // pred_check_branch
    %13 = sbr.rel (0) target = $region5
  $region4: #{tpu_custom_call.1} parent=0 // pred_region
    _
  $region5: #{tpu_custom_call.1} parent=0 // pred_fallthru
    _
  // Predicated region
  $region6: #{tpu_custom_call.1} parent=0 // pred_check
    _
  $region7: #{tpu_custom_call.1} parent=0 // pred_check_branch
    %15 = sbr.rel (0) target = $region9
  $region8: #{tpu_custom_call.1} parent=0 // pred_region
    _
  $region9: #{tpu_custom_call.1} parent=0 // pred_fallthru
    _
  // Predicated region
  $region10: #{tpu_custom_call.1} parent=0 // pred_check
    _
  $region11: #{tpu_custom_call.1} parent=0 // pred_check_branch
    %17 = sbr.rel (0) target = $region13
  $region12: #{tpu_custom_call.1} parent=0 // pred_region
    _
  $region13: #{tpu_custom_call.1} parent=0 // pred_fallthru
    _
  // Predicated region
  $region14: #{tpu_custom_call.1} parent=0 // pred_check
    _
  $region15: #{tpu_custom_call.1} parent=0 // pred_check_branch
    %19 = sbr.rel (0) target = $region17
  $region16: #{tpu_custom_call.1} parent=0 // pred_region
    _
  $region17: #{tpu_custom_call.1} parent=0 // pred_fallthru
    _
  // Predicated region
  $region18: #{tpu_custom_call.1} parent=0 // pred_check
    _
  $region19: #{tpu_custom_call.1} parent=0 // pred_check_branch
    %21 = sbr.rel (0) target = $region21
  $region20: #{tpu_custom_call.1} parent=0 // pred_region
    _
  $region21: #{tpu_custom_call.1} parent=0 // pred_fallthru
    _
  // Predicated region
  $region22: #{tpu_custom_call.1} parent=0 // pred_check
    _
  $region23: #{tpu_custom_call.1} parent=0 // pred_check_branch
    %23 = sbr.rel (0) target = $region25
  $region24: #{tpu_custom_call.1} parent=0 // pred_region
    _
  $region25: #{tpu_custom_call.1} parent=0 // pred_fallthru
    _
  // Predicated region
  $region26: #{tpu_custom_call.1} parent=0 // pred_check
    _
  $region27: #{tpu_custom_call.1} parent=0 // pred_check_branch
    %25 = sbr.rel (0) target = $region29
  $region28: #{tpu_custom_call.1} parent=0 // pred_region
    _
  $region29: #{tpu_custom_call.1} parent=0 // pred_fallthru
    _
  %v27 = vld [vmem:[%s0] sm:$0xff]
  %v28 = vld [vmem:[%s0 + $0x8] sm:$0xff]
  %v29 = vpack.c.bf16 %v28, %v27
  %v30 = vld [vmem:[%s1] sm:$0xf]
  %v31 = vld [vmem:[%s2] sm:$0x1]
  %v33 = vlaneseq
  %v34 = vshrl.u32 %v33, 7
  %v35 = vsub.s32 0, %v34
  %v36 = vrot.slane %v31, %v35
  %vm38 = vcmask 64512
  %v40 = vsel %vm38, %v29, 0
  %vm42 = vcmask 1043456
  %v44 = vsel %vm42, %v30, 0
  %46 = vmatprep.subr.bf16.mxu0 0
  %47 = vmatpush1.bf16.msra.mxu0 %v44
  %48 = vmatprep.subr.bf16.mxu0 0
  %49 = vmatpush1.bf16.msra.mxu0 0
  %50 = vmatprep.subr.bf16.mxu0 0
  %51 = vmatpush1.bf16.msra.mxu0 0
  %52 = vmatprep.subr.bf16.mxu0 0
  %53 = vmatpush1.bf16.msra.mxu0 0
  %54 = vmatprep.subr.bf16.mxu0 0
  %55 = vmatpush1.bf16.msra.mxu0 0
  %56 = vmatprep.subr.bf16.mxu0 0
  %57 = vmatpush1.bf16.msra.mxu0 0
  %58 = vmatprep.subr.bf16.mxu0 0
  %59 = vmatpush1.bf16.msra.mxu0 0
  %60 = vmatprep.subr.bf16.mxu0 0
  %61 = vmatpush1.bf16.msra.mxu0 0
  %62 = vmatprep.subr.bf16.mxu0 0
  %63 = vmatpush1.bf16.msra.mxu0 0
  %64 = vmatprep.subr.bf16.mxu0 0
  %65 = vmatpush1.bf16.msra.mxu0 0
  %66 = vmatprep.subr.bf16.mxu0 0
  %67 = vmatpush1.bf16.msra.mxu0 0
  %68 = vmatprep.subr.bf16.mxu0 0
  %69 = vmatpush1.bf16.msra.mxu0 0
  %70 = vmatprep.subr.bf16.mxu0 0
  %71 = vmatpush1.bf16.msra.mxu0 0
  %72 = vmatprep.subr.bf16.mxu0 0
  %73 = vmatpush1.bf16.msra.mxu0 0
  %74 = vmatprep.subr.bf16.mxu0 0
  %75 = vmatpush1.bf16.msra.mxu0 0
  %76 = vmatprep.subr.bf16.mxu0 0
  %77 = vmatpush1.bf16.msra.mxu0 0
  %78 = vmatprep.mubr.bf16.mxu0 0
  %79 = vmatmul.mubr.bf16.gmra.mrb[0].mxu0 %v40
  %v80 = vpop.f32.mrb[0].mxu0
  %v81 = vadd.f32 %v36, %v80
  %v82 = vpop.f32.mrb[0].mxu0
  %v83 = vpop.f32.mrb[0].mxu0
  %v84 = vadd.f32 %v36, %v83
  %v85 = vpop.f32.mrb[0].mxu0
  %86 = vdwg.mxu0
  %v87 = vmax.f32 %v81, 0.0
  %v88 = vmax.f32 %v84, 0.0
  %v89 = vpack.c.bf16 %v88, %v87
  %v90 = vld [vmem:[%s3] sm:$0xf]
  %v91 = vld [vmem:[%s3 + $0x4] sm:$0xf]
  %v92 = vld [vmem:[%s3 + $0x8] sm:$0xf]
  %v93 = vld [vmem:[%s3 + $0xc] sm:$0xf]
  %v94 = vld [vmem:[%s3 + $0x10] sm:$0xf]
  %v95 = vld [vmem:[%s3 + $0x14] sm:$0xf]
  %v96 = vld [vmem:[%s3 + $0x18] sm:$0xf]
  %v97 = vld [vmem:[%s3 + $0x1c] sm:$0xf]
  %v98 = vld [vmem:[%s4] sm:$0x1]
  %v100 = vlaneseq
  %v101 = vshrl.u32 %v100, 7
  %v102 = vsub.s32 0, %v101
  %v103 = vrot.slane %v98, %v102
  %v113 = vunpack.c.l.b16 %v90
  %v114 = vunpack.c.l.b16 %v91
  %v115 = vunpack.c.l.b16 %v92
  %v116 = vunpack.c.l.b16 %v93
  %v117 = vunpack.c.l.b16 %v94
  %v118 = vunpack.c.l.b16 %v95
  %v119 = vunpack.c.l.b16 %v96
  %v120 = vunpack.c.l.b16 %v97
  %v121 = vpack.c.b16 %v114, %v113
  %v122 = vpack.c.b16 %v116, %v115
  %v123 = vpack.c.b16 %v118, %v117
  %v124 = vpack.c.b16 %v120, %v119
  %vm129 = vcmask 523264
  %v131 = vsel %vm129, %v89, 0
  %133 = vmatprep.subr.bf16.mxu0 0
  %134 = vmatpush1.bf16.msra.mxu0 %v121
  %135 = vmatprep.subr.bf16.mxu0 0
  %136 = vmatpush1.bf16.msra.mxu0 %v122
  %137 = vmatprep.subr.bf16.mxu0 0
  %138 = vmatpush1.bf16.msra.mxu0 %v123
  %139 = vmatprep.subr.bf16.mxu0 0
  %140 = vmatpush1.bf16.msra.mxu0 %v124
  %141 = vmatprep.subr.bf16.mxu0 0
  %142 = vmatpush1.bf16.msra.mxu0 0
  %143 = vmatprep.subr.bf16.mxu0 0
  %144 = vmatpush1.bf16.msra.mxu0 0
  %145 = vmatprep.subr.bf16.mxu0 0
  %146 = vmatpush1.bf16.msra.mxu0 0
  %147 = vmatprep.subr.bf16.mxu0 0
  %148 = vmatpush1.bf16.msra.mxu0 0
  %149 = vmatprep.subr.bf16.mxu0 0
  %150 = vmatpush1.bf16.msra.mxu0 0
  %151 = vmatprep.subr.bf16.mxu0 0
  %152 = vmatpush1.bf16.msra.mxu0 0
  %153 = vmatprep.subr.bf16.mxu0 0
  %154 = vmatpush1.bf16.msra.mxu0 0
  %155 = vmatprep.subr.bf16.mxu0 0
  %156 = vmatpush1.bf16.msra.mxu0 0
  %157 = vmatprep.subr.bf16.mxu0 0
  %158 = vmatpush1.bf16.msra.mxu0 0
  %159 = vmatprep.subr.bf16.mxu0 0
  %160 = vmatpush1.bf16.msra.mxu0 0
  %161 = vmatprep.subr.bf16.mxu0 0
  %162 = vmatpush1.bf16.msra.mxu0 0
  %163 = vmatprep.subr.bf16.mxu0 0
  %164 = vmatpush1.bf16.msra.mxu0 0
  %165 = vmatprep.mubr.bf16.mxu0 0
  %166 = vmatmul.mubr.bf16.gmra.mrb[0].mxu0 %v131
  %v167 = vpop.f32.mrb[0].mxu0
  %v168 = vadd.f32 %v103, %v167
  %v169 = vpop.f32.mrb[0].mxu0
  %v170 = vpop.f32.mrb[0].mxu0
  %v171 = vadd.f32 %v103, %v170
  %v172 = vpop.f32.mrb[0].mxu0
  %173 = vdwg.mxu0
  %v174 = vmax.f32 %v168, 0.0
  %v175 = vmax.f32 %v171, 0.0
  %v176 = vpack.c.bf16 %v175, %v174
  %v177 = vld [vmem:[%s5] sm:$0xf]
  %v178 = vld [vmem:[%s5 + $0x4] sm:$0xf]
  %v179 = vld [vmem:[%s5 + $0x8] sm:$0xf]
  %v180 = vld [vmem:[%s5 + $0xc] sm:$0xf]
  %v181 = vld [vmem:[%s5 + $0x10] sm:$0xf]
  %v182 = vld [vmem:[%s5 + $0x14] sm:$0xf]
  %v183 = vld [vmem:[%s5 + $0x18] sm:$0xf]
  %v184 = vld [vmem:[%s5 + $0x1c] sm:$0xf]
  %v185 = vld [vmem:[%s6] sm:$0x1]
  %v187 = vlaneseq
  %v188 = vshrl.u32 %v187, 7
  %v189 = vsub.s32 0, %v188
  %v190 = vrot.slane %v185, %v189
  %v200 = vunpack.c.l.b16 %v177
  %v201 = vunpack.c.l.b16 %v178
  %v202 = vunpack.c.l.b16 %v179
  %v203 = vunpack.c.l.b16 %v180
  %v204 = vunpack.c.l.b16 %v181
  %v205 = vunpack.c.l.b16 %v182
  %v206 = vunpack.c.l.b16 %v183
  %v207 = vunpack.c.l.b16 %v184
  %v208 = vpack.c.b16 %v201, %v200
  %v209 = vpack.c.b16 %v203, %v202
  %v210 = vpack.c.b16 %v205, %v204
  %v211 = vpack.c.b16 %v207, %v206
  %v217 = vsel %vm129, %v176, 0
  %219 = vmatprep.subr.bf16.mxu0 0
  %220 = vmatpush1.bf16.msra.mxu0 %v208
  %221 = vmatprep.subr.bf16.mxu0 0
  %222 = vmatpush1.bf16.msra.mxu0 %v209
  %223 = vmatprep.subr.bf16.mxu0 0
  %224 = vmatpush1.bf16.msra.mxu0 %v210
  %225 = vmatprep.subr.bf16.mxu0 0
  %226 = vmatpush1.bf16.msra.mxu0 %v211
  %227 = vmatprep.subr.bf16.mxu0 0
  %228 = vmatpush1.bf16.msra.mxu0 0
  %229 = vmatprep.subr.bf16.mxu0 0
  %230 = vmatpush1.bf16.msra.mxu0 0
  %231 = vmatprep.subr.bf16.mxu0 0
  %232 = vmatpush1.bf16.msra.mxu0 0
  %233 = vmatprep.subr.bf16.mxu0 0
  %234 = vmatpush1.bf16.msra.mxu0 0
  %235 = vmatprep.subr.bf16.mxu0 0
  %236 = vmatpush1.bf16.msra.mxu0 0
  %237 = vmatprep.subr.bf16.mxu0 0
  %238 = vmatpush1.bf16.msra.mxu0 0
  %239 = vmatprep.subr.bf16.mxu0 0
  %240 = vmatpush1.bf16.msra.mxu0 0
  %241 = vmatprep.subr.bf16.mxu0 0
  %242 = vmatpush1.bf16.msra.mxu0 0
  %243 = vmatprep.subr.bf16.mxu0 0
  %244 = vmatpush1.bf16.msra.mxu0 0
  %245 = vmatprep.subr.bf16.mxu0 0
  %246 = vmatpush1.bf16.msra.mxu0 0
  %247 = vmatprep.subr.bf16.mxu0 0
  %248 = vmatpush1.bf16.msra.mxu0 0
  %249 = vmatprep.subr.bf16.mxu0 0
  %250 = vmatpush1.bf16.msra.mxu0 0
  %251 = vmatprep.mubr.bf16.mxu0 0
  %252 = vmatmul.mubr.bf16.gmra.mrb[0].mxu0 %v217
  %v253 = vpop.f32.mrb[0].mxu0
  %v254 = vadd.f32 %v190, %v253
  %v255 = vpop.f32.mrb[0].mxu0
  %v256 = vpop.f32.mrb[0].mxu0
  %v257 = vadd.f32 %v190, %v256
  %v258 = vpop.f32.mrb[0].mxu0
  %259 = vdwg.mxu0
  %v260 = vpack.c.bf16 %v257, %v254
  %v262 = vunpack.c.l.b16 %v260
  %v263 = vunpack.c.h.b16 %v260
  %v264 = vpack.c.b16 %v262, %v262
  %v265 = vpack.c.b16 %v263, %v263
  %vm268 = vcmask 27648
  %269 = vst.msk [vmem:[%s7] sm:$0xf] %vm268, %v264
  %270 = vst.msk [vmem:[%s7 + $0x4] sm:$0xf] %vm268, %v265
  // Predicated region
  $region30: #{tpu_custom_call.1} parent=0 // pred_check
    _
  $region31: #{tpu_custom_call.1} parent=0 // pred_check_branch
    %272 = sbr.rel (0) target = $region33
  $region32: #{tpu_custom_call.1} parent=0 // pred_region
    _
  $region33: #{tpu_custom_call.1} parent=0 // pred_fallthru
    _
  // Predicated region
  $region34: #{tpu_custom_call.1} parent=0 // pred_check
    _
  $region35: #{tpu_custom_call.1} parent=0 // pred_check_branch
    %274 = sbr.rel (0) target = $region37
  $region36: #{tpu_custom_call.1} parent=0 // pred_region
    _
  $region37: #{tpu_custom_call.1} parent=0 // pred_fallthru
    _

</llo_original>
